<compile_context>
chip_gen: v6e
topology: v6e:2x2x1
jax: 0.10.0
libtpu: 0.0.40
codegen_flags: <defaults>
</compile_context>

<pallas_src>
import jax
import jax.numpy as jnp
from jax.experimental import pallas as pl
from jax.experimental.pallas import tpu as pltpu


def _round_up(x, m):
    return (x + m - 1) // m * m


# ---------------------------------------------------------------------------
# Fused loss kernel: per-(batch, frame-tile) partial sums for both losses.
# ---------------------------------------------------------------------------
def _stft_loss_partials_kernel(x_ref, y_ref, log_ref, dsq_ref, ysq_ref):
    """One grid step = one (batch, frame-tile) block.

    x_ref, y_ref : (1, TF, Np) VMEM tiles of the (padded) magnitude specs
    log_ref      : (1, 1, Np) partial sum over frames of |log(y) - log(x)|
    dsq_ref      : (1, 1, Np) partial sum over frames of (y - x)^2
    ysq_ref      : (1, 1, Np) partial sum over frames of y^2

    Only the frame (sublane) axis is reduced in-kernel; the freq (lane) axis is
    kept so the output stores stay lane-dense (no cross-lane reduce, no masked
    1-lane scalar store).  The tiny (B, n_tiles, Np) reduction plus the final
    normalizations happen in the JAX wrapper.
    """
    x = x_ref[0].astype(jnp.float32)            # (TF, Np)
    y = y_ref[0].astype(jnp.float32)            # (TF, Np)

    # Fused logs: |log(y) - log(x)| == |log(y / x)|  -> one EUP log per element.
    log_l1 = jnp.abs(jnp.log(y / x))
    d = y - x

    log_ref[0, 0, :] = jnp.sum(log_l1, axis=0)
    dsq_ref[0, 0, :] = jnp.sum(d * d, axis=0)
    ysq_ref[0, 0, :] = jnp.sum(y * y, axis=0)


def _stft_loss_partials(x_mag, y_mag, *, target_block_bytes=2 * 1024 * 1024):
    """Run the fused Pallas kernel; return per-instance raw sums."""
    B, F, N = x_mag.shape

    # Lane-dense freq axis and a bounded frame tile (multiple of 8) so that
    # 2 inputs x 2 pipeline buffers x TF*Np*4B stays well under the scoped
    # VMEM limit on every generation (v5e/v6e/v7x).
    Np = _round_up(N, 128)
    bytes_per_row = Np * 4
    tf_cap = max(8, (target_block_bytes // bytes_per_row) // 8 * 8)
    TF = int(min(tf_cap, _round_up(F, 8)))
    Fp = _round_up(F, TF)
    n_tiles = Fp // TF

    # Pad BOTH inputs with 1.0: |log(1/1)| = 0 and (1-1)^2 = 0, so only the y^2
    # sum picks up exactly 1.0 per padded element (corrected below).
    pad = ((0, 0), (0, Fp - F), (0, Np - N))
    xp = jnp.pad(x_mag.astype(jnp.float32), pad, constant_values=1.0)
    yp = jnp.pad(y_mag.astype(jnp.float32), pad, constant_values=1.0)

    out_sds = jax.ShapeDtypeStruct((B, n_tiles, Np), jnp.float32)
    in_spec = pl.BlockSpec((1, TF, Np), lambda b, t: (b, t, 0))
    out_spec = pl.BlockSpec((1, 1, Np), lambda b, t: (b, t, 0))

    log_p, dsq_p, ysq_p = pl.pallas_call(
        _stft_loss_partials_kernel,
        out_shape=(out_sds, out_sds, out_sds),
        grid_spec=pltpu.PrefetchScalarGridSpec(
            num_scalar_prefetch=0,
            grid=(B, n_tiles),
            in_specs=[in_spec, in_spec],
            out_specs=[out_spec, out_spec, out_spec],
        ),
        compiler_params=pltpu.CompilerParams(
            # No cross-step accumulation -> both grid axes are parallel
            # (lets the v7x megacore shard across batch AND frame tiles).
            dimension_semantics=("parallel", "parallel"),
            vmem_limit_bytes=32 * 1024 * 1024,
        ),
    )(xp, yp)

    log_sum = jnp.sum(log_p, axis=(1, 2))                       # (B,)
    dsq_sum = jnp.sum(dsq_p, axis=(1, 2))                       # (B,)
    # Each of the (Fp*Np - F*N) padded elements contributed exactly 1.0 to y^2.
    pad_count = jnp.float32(Fp * Np - F * N)
    ysq_sum = jnp.sum(ysq_p, axis=(1, 2)) - pad_count           # (B,)
    return log_sum, dsq_sum, ysq_sum, F * N


def reduce_loss(loss, reduction):
    if reduction == "mean":
        return loss.mean()
    elif reduction == "sum":
        return loss.sum()
    elif reduction == "instance":
        return loss
    else:
        raise ValueError("Unknown loss reduction option.")


def spectral_losses(x_mag, y_mag, reduction="instance"):
    """Fused SpectralConvergenceLoss + LogSTFTMagnitudeLoss on magnitude specs."""
    assert x_mag.shape == y_mag.shape and x_mag.ndim == 3
    log_sum, dsq_sum, ysq_sum, n_elems = _stft_loss_partials(x_mag, y_mag)
    mag_loss = log_sum / jnp.float32(n_elems)                   # mean over (F, N)
    sc_loss = jnp.sqrt(dsq_sum) / jnp.sqrt(ysq_sum)             # ||y-x||_F / ||y||_F
    return reduce_loss(sc_loss, reduction), reduce_loss(mag_loss, reduction)


# ---------------------------------------------------------------------------
# STFT -> magnitude spectrogram (plain JAX; matches torch.stft semantics).
# ---------------------------------------------------------------------------
def _hann_window(win_length, dtype=jnp.float32):
    # torch.hann_window(win_length) is periodic.
    n = jnp.arange(win_length, dtype=dtype)
    return 0.5 - 0.5 * jnp.cos(2.0 * jnp.pi * n / win_length)


def _stft_magnitude(x, fft_size, shift_size, win_length, window):
    """torch.stft(center=True, reflect pad, onesided) -> clamp(1e-8).sqrt()."""
    # TODO(synk): the FFT has no clean Pallas equivalent; framing + jnp.fft.rfft
    # run as ordinary XLA ops, only the loss math runs in Pallas.
    pad_l = (fft_size - win_length) // 2
    pad_r = fft_size - win_length - pad_l
    win = jnp.pad(window, (pad_l, pad_r))

    half = fft_size // 2
    xp = jnp.pad(x, ((0, 0), (half, half)), mode="reflect")
    n_frames = 1 + (xp.shape[-1] - fft_size) // shift_size
    idx = (jnp.arange(n_frames)[:, None] * shift_size
           + jnp.arange(fft_size)[None, :])
    frames = xp[:, idx] * win[None, None, :]                    # (B, frames, fft)
    spec = jnp.fft.rfft(frames, axis=-1)                        # (B, frames, freq)
    power = jnp.real(spec) ** 2 + jnp.imag(spec) ** 2
    return jnp.sqrt(jnp.maximum(power, 1e-8)).astype(jnp.float32)


def stft_loss(pred, target, *, fft_size=1024, shift_size=120, win_length=600,
              reduction="instance"):
    """STFTLoss.forward: returns (sc_loss, mag_loss)."""
    window = _hann_window(win_length)
    x_mag = _stft_magnitude(pred, fft_size, shift_size, win_length, window)
    y_mag = _stft_magnitude(target, fft_size, shift_size, win_length, window)
    return spectral_losses(x_mag, y_mag, reduction)


if __name__ == "__main__":
    key = jax.random.PRNGKey(0)
    kx, ky = jax.random.split(key)

    B, T = 2, 2400                                   # small raw-signal shapes
    fft_size, shift_size, win_length = 1024, 120, 600
    pred = jax.random.normal(kx, (B, T), dtype=jnp.float32)
    target = jax.random.normal(ky, (B, T), dtype=jnp.float32)

    sc_loss, mag_loss = stft_loss(
        pred, target, fft_size=fft_size, shift_size=shift_size,
        win_length=win_length, reduction="instance")
    sc_loss, mag_loss = jax.block_until_ready((sc_loss, mag_loss))

    # Pure-JAX reference for correctness.
    window = _hann_window(win_length)
    x_mag = _stft_magnitude(pred, fft_size, shift_size, win_length, window)
    y_mag = _stft_magnitude(target, fft_size, shift_size, win_length, window)
    ref_mag = jnp.mean(jnp.abs(jnp.log(y_mag) - jnp.log(x_mag)), axis=(1, 2))
    ref_sc = (jnp.sqrt(jnp.sum((y_mag - x_mag) ** 2, axis=(1, 2)))
              / jnp.sqrt(jnp.sum(y_mag ** 2, axis=(1, 2))))

    assert sc_loss.shape == (B,) and mag_loss.shape == (B,)
    assert jnp.allclose(mag_loss, ref_mag, atol=1e-5, rtol=1e-4)
    assert jnp.allclose(sc_loss, ref_sc, atol=1e-5, rtol=1e-4)

    print("KERNEL_OK")
</pallas_src>

<mosaic_0001>
module attributes {stable_mosaic.version = 11 : i64} {
  func.func @_stft_loss_partials_kernel(%arg0: i32, %arg1: i32, %arg2: memref<1x24x640xf32, #tpu.memory_space<vmem>>, %arg3: memref<1x24x640xf32, #tpu.memory_space<vmem>>, %arg4: memref<1x1x640xf32, #tpu.memory_space<vmem>>, %arg5: memref<1x1x640xf32, #tpu.memory_space<vmem>>, %arg6: memref<1x1x640xf32, #tpu.memory_space<vmem>>) attributes {dimension_semantics = [#tpu.dimension_semantics<parallel>, #tpu.dimension_semantics<parallel>], iteration_bounds = array<i64: 2, 1>, scalar_prefetch = 0 : i64, scratch_operands = 0 : i64, tpu.core_type = #tpu.core_type<tc>, window_params = [{transform_indices = @transform_0, window_bounds = array<i64: 1, 24, 640>}, {transform_indices = @transform_1, window_bounds = array<i64: 1, 24, 640>}, {transform_indices = @transform_2, window_bounds = array<i64: 1, 1, 640>}, {transform_indices = @transform_3, window_bounds = array<i64: 1, 1, 640>}, {transform_indices = @transform_4, window_bounds = array<i64: 1, 1, 640>}]} {
    %c0 = arith.constant 0 : index
    %c0_0 = arith.constant 0 : index
    %c0_1 = arith.constant 0 : index
    %0 = vector.load %arg2[%c0, %c0_0, %c0_1] : memref<1x24x640xf32, #tpu.memory_space<vmem>>, vector<1x24x640xf32>
    %1 = vector.shape_cast %0 : vector<1x24x640xf32> to vector<24x640xf32>
    %c0_2 = arith.constant 0 : index
    %c0_3 = arith.constant 0 : index
    %c0_4 = arith.constant 0 : index
    %2 = vector.load %arg3[%c0_2, %c0_3, %c0_4] : memref<1x24x640xf32, #tpu.memory_space<vmem>>, vector<1x24x640xf32>
    %3 = vector.shape_cast %2 : vector<1x24x640xf32> to vector<24x640xf32>
    %4 = arith.divf %3, %1 : vector<24x640xf32>
    %5 = math.log %4 : vector<24x640xf32>
    %6 = math.absf %5 : vector<24x640xf32>
    %7 = arith.subf %3, %1 : vector<24x640xf32>
    %cst = arith.constant dense<0.000000e+00> : vector<640xf32>
    %8 = vector.multi_reduction <add>, %6, %cst [0] : vector<24x640xf32> to vector<640xf32>
    %c0_5 = arith.constant 0 : index
    %c0_6 = arith.constant 0 : index
    %c0_7 = arith.constant 0 : index
    %9 = vector.load %arg4[%c0_5, %c0_6, %c0_7] : memref<1x1x640xf32, #tpu.memory_space<vmem>>, vector<1x1x640xf32>
    %10 = vector.shape_cast %9 : vector<1x1x640xf32> to vector<640xf32>
    %11 = vector.shape_cast %8 : vector<640xf32> to vector<1x1x640xf32>
    tpu.vector_store %arg4[%c0_5, %c0_6, %c0_7], %11 {strides = array<i32>} : memref<1x1x640xf32, #tpu.memory_space<vmem>>, vector<1x1x640xf32>,
    %12 = arith.mulf %7, %7 : vector<24x640xf32>
    %cst_8 = arith.constant dense<0.000000e+00> : vector<640xf32>
    %13 = vector.multi_reduction <add>, %12, %cst_8 [0] : vector<24x640xf32> to vector<640xf32>
    %c0_9 = arith.constant 0 : index
    %c0_10 = arith.constant 0 : index
    %c0_11 = arith.constant 0 : index
    %14 = vector.load %arg5[%c0_9, %c0_10, %c0_11] : memref<1x1x640xf32, #tpu.memory_space<vmem>>, vector<1x1x640xf32>
    %15 = vector.shape_cast %14 : vector<1x1x640xf32> to vector<640xf32>
    %16 = vector.shape_cast %13 : vector<640xf32> to vector<1x1x640xf32>
    tpu.vector_store %arg5[%c0_9, %c0_10, %c0_11], %16 {strides = array<i32>} : memref<1x1x640xf32, #tpu.memory_space<vmem>>, vector<1x1x640xf32>,
    %17 = arith.mulf %3, %3 : vector<24x640xf32>
    %cst_12 = arith.constant dense<0.000000e+00> : vector<640xf32>
    %18 = vector.multi_reduction <add>, %17, %cst_12 [0] : vector<24x640xf32> to vector<640xf32>
    %c0_13 = arith.constant 0 : index
    %c0_14 = arith.constant 0 : index
    %c0_15 = arith.constant 0 : index
    %19 = vector.load %arg6[%c0_13, %c0_14, %c0_15] : memref<1x1x640xf32, #tpu.memory_space<vmem>>, vector<1x1x640xf32>
    %20 = vector.shape_cast %19 : vector<1x1x640xf32> to vector<640xf32>
    %21 = vector.shape_cast %18 : vector<640xf32> to vector<1x1x640xf32>
    tpu.vector_store %arg6[%c0_13, %c0_14, %c0_15], %21 {strides = array<i32>} : memref<1x1x640xf32, #tpu.memory_space<vmem>>, vector<1x1x640xf32>,
    return
  }
  func.func @transform_0(%arg0: i32, %arg1: i32) -> (i32, i32, i32) {
    %c0_i32 = arith.constant 0 : i32
    %c0_i32_0 = arith.constant 0 : i32
    return %arg0, %arg1, %c0_i32 : i32, i32, i32
  }
  func.func @transform_1(%arg0: i32, %arg1: i32) -> (i32, i32, i32) {
    %c0_i32 = arith.constant 0 : i32
    %c0_i32_0 = arith.constant 0 : i32
    return %arg0, %arg1, %c0_i32 : i32, i32, i32
  }
  func.func @transform_2(%arg0: i32, %arg1: i32) -> (i32, i32, i32) {
    %c0_i32 = arith.constant 0 : i32
    %c0_i32_0 = arith.constant 0 : i32
    return %arg0, %arg1, %c0_i32 : i32, i32, i32
  }
  func.func @transform_3(%arg0: i32, %arg1: i32) -> (i32, i32, i32) {
    %c0_i32 = arith.constant 0 : i32
    %c0_i32_0 = arith.constant 0 : i32
    return %arg0, %arg1, %c0_i32 : i32, i32, i32
  }
  func.func @transform_4(%arg0: i32, %arg1: i32) -> (i32, i32, i32) {
    %c0_i32 = arith.constant 0 : i32
    %c0_i32_0 = arith.constant 0 : i32
    return %arg0, %arg1, %c0_i32 : i32, i32, i32
  }
}

</mosaic_0001>

<llo_original>
// kernel: tpu_custom_call.1
$region0: #{tpu_custom_call.1}
  #allocation0 [shape = 'u32[]', space=smem, size = 0x4, offset = 0x4, fixed_abs, tag = 'smem constant byte address 0x4 - core index']
  #allocation1 [shape = 'u32[144,128]{1,0:T(1,128)}', space=vmem, size = 0x12000, scoped, tag = 'internal scratch']
  %s0 = inlined_call_operand.hbm [shape: f32[2,24,640], index: 0, kind: input, shape index: {}]
  %s1 = inlined_call_operand.hbm [shape: f32[2,24,640], index: 1, kind: input, shape index: {}]
  %s2 = inlined_call_operand.hbm [shape: f32[2,1,640], index: 2, kind: output, shape index: {0}]
  %s3 = inlined_call_operand.hbm [shape: f32[2,1,640], index: 3, kind: output, shape index: {1}]
  %s4 = inlined_call_operand.hbm [shape: f32[2,1,640], index: 4, kind: output, shape index: {2}]
  %5 = xla_tuple %s2, %s3, %s4
  %s6 = sld [smem:[#allocation0]]
  $region65: #{tpu_custom_call.1} parent=0
    _
  %s8 = ssub.s32 1, %s6
  %s9 = scalar_select 0, %s8, %s6
  $region1: #{tpu_custom_call.1} parent=0
    #allocation2 [shape = 'u8[122880]{0}', space=vmem, size = 0x1e000, scoped, tag = 'input window, operand 0']
    #allocation3 [shape = 's32[2]{0}', space=sflag, size = 0x8, scoped, tag = 'scoped memory for tpu_custom_call.1']
    #allocation4 [shape = 's32[2]{0}', space=sflag, size = 0x8, scoped, tag = 'scoped memory for tpu_custom_call.1']
    #allocation5 [shape = 'u8[122880]{0}', space=vmem, size = 0x1e000, scoped, tag = 'input window, operand 1']
    #allocation6 [shape = 's32[2]{0}', space=sflag, size = 0x8, scoped, tag = 'scoped memory for tpu_custom_call.1']
    #allocation7 [shape = 'u8[5120]{0}', space=vmem, size = 0x1400, scoped, tag = 'output window, operand 0']
    #allocation8 [shape = 'u8[5120]{0}', space=vmem, size = 0x1400, scoped, tag = 'output window, operand 1']
    #allocation9 [shape = 's32[2]{0}', space=sflag, size = 0x8, scoped, tag = 'scoped memory for tpu_custom_call.1']
    #allocation10 [shape = 'u8[5120]{0}', space=vmem, size = 0x1400, scoped, tag = 'output window, operand 2']
    %10 = vsyncpa [#allocation3], 0
    %s11 = scalar_lea.sflag [#allocation3], 1
    %12 = vsyncpa %s11, 0
    %13 = vsyncpa [#allocation6], 0
    %s14 = scalar_lea.sflag [#allocation6], 1
    %15 = vsyncpa %s14, 0
    %16 = vsyncpa [#allocation4], 0
    %s17 = scalar_lea.sflag [#allocation4], 1
    %18 = vsyncpa %s17, 0
    %19 = vsyncpa [#allocation9], 0
    %s20 = scalar_lea.sflag [#allocation9], 1
    %21 = vsyncpa %s20, 0
    loop: start=0, step=1, limit=4
    $region2: #{tpu_custom_call.1} parent=1 // loop_pre_header
      _
    $region3: #{tpu_custom_call.1} parent=1 // loop_header
      %s23 = sphi 0, %s27
      %p24 = scmp.ge.s32.totalorder %s23, 4
      %s30 = sphi 0, %s42
      %s31 = sphi 0, %s38
      %s32 = sphi 0, %s30
      %s33 = sphi 0, %s31
      %s34 = sphi 0, %s32
      %s35 = sphi 0, %s33
      %s47 = sphi 0, %s49
      %s50 = sphi 0, %s47
      %s51 = sphi 0, %s50
      %s67 = sphi 0, %s51
      %s75 = sphi 0, %s77
      %s78 = sphi 0, %s75
      %s79 = sphi 0, %s78
      %s95 = sphi 0, %s79
      %s103 = sphi 0, %s105
      %s106 = sphi 0, %s103
      %s107 = sphi 0, %s106
      %s123 = sphi 0, %s107
      %s131 = sphi 0, %s133
      %s134 = sphi 0, %s131
      %s135 = sphi 0, %s134
      %s151 = sphi 0, %s135
      %s159 = sphi 0, %s161
      %s162 = sphi 0, %s159
      %s163 = sphi 0, %s162
      %s179 = sphi 0, %s163
    $region4: #{tpu_custom_call.1} parent=1 // loop_header_branch
      %26 = sbr.rel (%p24) target = $region8
    $region5: #{tpu_custom_call.1} parent=1 // loop_body
      %s28 = ssub.s32 %s23, 1
      %s29 = ssub.s32 %s23, 2
      %s36 = sadd.s32 1, %s31
      %p37 = scmp.ge.s32.totalorder %s36, 1
      %s38 = scalar_select %p37, 0, %s36
      %s39 = sadd.s32 1, %s30
      %s40 = scalar_select %p37, %s39, %s30
      %p41 = scmp.ge.s32.totalorder %s40, 2
      %s42 = scalar_select %p41, 0, %s40
      %s43 = ssub.s32 %s30, %s42
      %s44 = ssub.s32 %s31, %s38
      %s45 = sor.u32 %s43, %s44
      %p46 = scmp.eq.s32.totalorder %s45, 0
      %s48 = sadd.s32 %s47, 1
      %s49 = scalar_select %p46, %s47, %s48
      %p52 = pneg %p46
      %p53 = scmp.eq.s32.totalorder %s23, 1
      %p54 = por %p52, %p53
      %p55 = scmp.ne.s32.totalorder %s47, %s50
      %p56 = scmp.eq.s32.totalorder %s23, 0
      %p57 = por %p55, %p56
      %p58 = scmp.ne.s32.totalorder %s47, %s50
      %p59 = scmp.eq.s32.totalorder %s28, 1
      %p60 = por %p58, %p59
      %p61 = scmp.ne.s32.totalorder %s50, %s51
      %p62 = scmp.eq.s32.totalorder %s28, 0
      %p63 = por %p61, %p62
      %p64 = scmp.ne.s32.totalorder %s50, %s51
      %p65 = scmp.eq.s32.totalorder %s29, 1
      %p66 = por %p64, %p65
      %p68 = scmp.ne.s32.totalorder %s51, %s67
      %p69 = scmp.eq.s32.totalorder %s29, 0
      %p70 = por %p68, %p69
      %s71 = ssub.s32 %s30, %s42
      %s72 = ssub.s32 %s31, %s38
      %s73 = sor.u32 %s71, %s72
      %p74 = scmp.eq.s32.totalorder %s73, 0
      %s76 = sadd.s32 %s75, 1
      %s77 = scalar_select %p74, %s75, %s76
      %p80 = pneg %p74
      %p81 = scmp.eq.s32.totalorder %s23, 1
      %p82 = por %p80, %p81
      %p83 = scmp.ne.s32.totalorder %s75, %s78
      %p84 = scmp.eq.s32.totalorder %s23, 0
      %p85 = por %p83, %p84
      %p86 = scmp.ne.s32.totalorder %s75, %s78
      %p87 = scmp.eq.s32.totalorder %s28, 1
      %p88 = por %p86, %p87
      %p89 = scmp.ne.s32.totalorder %s78, %s79
      %p90 = scmp.eq.s32.totalorder %s28, 0
      %p91 = por %p89, %p90
      %p92 = scmp.ne.s32.totalorder %s78, %s79
      %p93 = scmp.eq.s32.totalorder %s29, 1
      %p94 = por %p92, %p93
      %p96 = scmp.ne.s32.totalorder %s79, %s95
      %p97 = scmp.eq.s32.totalorder %s29, 0
      %p98 = por %p96, %p97
      %s99 = ssub.s32 %s30, %s42
      %s100 = ssub.s32 %s31, %s38
      %s101 = sor.u32 %s99, %s100
      %p102 = scmp.eq.s32.totalorder %s101, 0
      %s104 = sadd.s32 %s103, 1
      %s105 = scalar_select %p102, %s103, %s104
      %p108 = pneg %p102
      %p109 = scmp.eq.s32.totalorder %s23, 1
      %p110 = por %p108, %p109
      %p111 = scmp.ne.s32.totalorder %s103, %s106
      %p112 = scmp.eq.s32.totalorder %s23, 0
      %p113 = por %p111, %p112
      %p114 = scmp.ne.s32.totalorder %s103, %s106
      %p115 = scmp.eq.s32.totalorder %s28, 1
      %p116 = por %p114, %p115
      %p117 = scmp.ne.s32.totalorder %s106, %s107
      %p118 = scmp.eq.s32.totalorder %s28, 0
      %p119 = por %p117, %p118
      %p120 = scmp.ne.s32.totalorder %s106, %s107
      %p121 = scmp.eq.s32.totalorder %s29, 1
      %p122 = por %p120, %p121
      %p124 = scmp.ne.s32.totalorder %s107, %s123
      %p125 = scmp.eq.s32.totalorder %s29, 0
      %p126 = por %p124, %p125
      %s127 = ssub.s32 %s30, %s42
      %s128 = ssub.s32 %s31, %s38
      %s129 = sor.u32 %s127, %s128
      %p130 = scmp.eq.s32.totalorder %s129, 0
      %s132 = sadd.s32 %s131, 1
      %s133 = scalar_select %p130, %s131, %s132
      %p136 = pneg %p130
      %p137 = scmp.eq.s32.totalorder %s23, 1
      %p138 = por %p136, %p137
      %p139 = scmp.ne.s32.totalorder %s131, %s134
      %p140 = scmp.eq.s32.totalorder %s23, 0
      %p141 = por %p139, %p140
      %p142 = scmp.ne.s32.totalorder %s131, %s134
      %p143 = scmp.eq.s32.totalorder %s28, 1
      %p144 = por %p142, %p143
      %p145 = scmp.ne.s32.totalorder %s134, %s135
      %p146 = scmp.eq.s32.totalorder %s28, 0
      %p147 = por %p145, %p146
      %p148 = scmp.ne.s32.totalorder %s134, %s135
      %p149 = scmp.eq.s32.totalorder %s29, 1
      %p150 = por %p148, %p149
      %p152 = scmp.ne.s32.totalorder %s135, %s151
      %p153 = scmp.eq.s32.totalorder %s29, 0
      %p154 = por %p152, %p153
      %s155 = ssub.s32 %s30, %s42
      %s156 = ssub.s32 %s31, %s38
      %s157 = sor.u32 %s155, %s156
      %p158 = scmp.eq.s32.totalorder %s157, 0
      %s160 = sadd.s32 %s159, 1
      %s161 = scalar_select %p158, %s159, %s160
      %p164 = pneg %p158
      %p165 = scmp.eq.s32.totalorder %s23, 1
      %p166 = por %p164, %p165
      %p167 = scmp.ne.s32.totalorder %s159, %s162
      %p168 = scmp.eq.s32.totalorder %s23, 0
      %p169 = por %p167, %p168
      %p170 = scmp.ne.s32.totalorder %s159, %s162
      %p171 = scmp.eq.s32.totalorder %s28, 1
      %p172 = por %p170, %p171
      %p173 = scmp.ne.s32.totalorder %s162, %s163
      %p174 = scmp.eq.s32.totalorder %s28, 0
      %p175 = por %p173, %p174
      %p176 = scmp.ne.s32.totalorder %s162, %s163
      %p177 = scmp.eq.s32.totalorder %s29, 1
      %p178 = por %p176, %p177
      %p180 = scmp.ne.s32.totalorder %s163, %s179
      %p181 = scmp.eq.s32.totalorder %s29, 0
      %p182 = por %p180, %p181
      %p183 = scmp.le.s32.totalorder 1, %s23
      %p184 = scmp.lt.s32.totalorder %s23, 3
      %p185 = pnand %p183, %p184
      %p186 = pneg %p185
      // Predicated region
      $region9: #{tpu_custom_call.1} parent=5 // pred_check
        _
      $region10: #{tpu_custom_call.1} parent=5 // pred_check_branch
        %188 = sbr.rel (%p185) target = $region12
      $region11: #{tpu_custom_call.1} parent=5 // pred_region
        %s189 = ssub.s32 %s23, 1
      $region12: #{tpu_custom_call.1} parent=5 // pred_fallthru
        _
      %p190 = scmp.lt.s32.totalorder %s23, 2
      // Predicated region
      $region13: #{tpu_custom_call.1} parent=5 // pred_check
        %p191 = pneg %p190
      $region14: #{tpu_custom_call.1} parent=5 // pred_check_branch
        %193 = sbr.rel (%p191) target = $region16
      $region15: #{tpu_custom_call.1} parent=5 // pred_region
        // Predicated region
        $region17: #{tpu_custom_call.1} parent=15 // pred_check
          %p194 = pneg %p57
        $region18: #{tpu_custom_call.1} parent=15 // pred_check_branch
          %196 = sbr.rel (%p194) target = $region20
        $region19: #{tpu_custom_call.1} parent=15 // pred_region
          %s197 = sand.u32 %s47, 1
          %s198 = scalar_lea.sflag [#allocation3], %s197
          %s199 = sand.u32 %s47, 1
          %s200 = smul.addr %s199, 120
          %s201 = scalar_lea.vmem [#allocation2], %s200
          %s202 = smul.u32 3, %s31
          %s204 = ssub.s32 1920, 1920
          %205 = vsyncadd %s198, %s204
          %s206 = smul.addr %s202, 5
          %s207 = smul.addr %s30, 15
          %s208 = sadd.s32 %s206, %s207
          %s209 = smul.addr %s208, 128
          %s210 = scalar_lea.hbm %s0, %s209
          %s211 = sshll.u32 %s201, 4
          %s212 = int_to_ptr.vmem [resolvable:$true] %s211
          %217 = dma.hbm_to_vmem [thread:$0]  %s210, 1920, %s212, %s198, 640, 640, 40
        $region20: #{tpu_custom_call.1} parent=15 // pred_fallthru
          _
        // Predicated region
        $region21: #{tpu_custom_call.1} parent=15 // pred_check
          %p218 = pneg %p85
        $region22: #{tpu_custom_call.1} parent=15 // pred_check_branch
          %220 = sbr.rel (%p218) target = $region24
        $region23: #{tpu_custom_call.1} parent=15 // pred_region
          %s221 = sand.u32 %s75, 1
          %s222 = scalar_lea.sflag [#allocation6], %s221
          %s223 = sand.u32 %s75, 1
          %s224 = smul.addr %s223, 120
          %s225 = scalar_lea.vmem [#allocation5], %s224
          %s226 = smul.u32 3, %s31
          %s228 = ssub.s32 1920, 1920
          %229 = vsyncadd %s222, %s228
          %s230 = smul.addr %s226, 5
          %s231 = smul.addr %s30, 15
          %s232 = sadd.s32 %s230, %s231
          %s233 = smul.addr %s232, 128
          %s234 = scalar_lea.hbm %s1, %s233
          %s235 = sshll.u32 %s225, 4
          %s236 = int_to_ptr.vmem [resolvable:$true] %s235
          %241 = dma.hbm_to_vmem [thread:$0]  %s234, 1920, %s236, %s222, 640, 640, 40
        $region24: #{tpu_custom_call.1} parent=15 // pred_fallthru
          _
      $region16: #{tpu_custom_call.1} parent=5 // pred_fallthru
        _
      %p242 = scmp.le.s32.totalorder 1, %s23
      %p243 = scmp.lt.s32.totalorder %s23, 3
      %p244 = pnand %p242, %p243
      %p245 = pneg %p244
      // Predicated region
      $region25: #{tpu_custom_call.1} parent=5 // pred_check
        _
      $region26: #{tpu_custom_call.1} parent=5 // pred_check_branch
        %247 = sbr.rel (%p244) target = $region28
      $region27: #{tpu_custom_call.1} parent=5 // pred_region
        %s248 = ssub.s32 %s23, 1
        %s249 = sand.u32 %s50, 1
        %s250 = scalar_lea.sflag [#allocation3], %s249
        %s251 = sand.u32 %s50, 1
        %s252 = smul.addr %s251, 120
        %s253 = scalar_lea.vmem [#allocation2], %s252
        // Predicated region
        $region29: #{tpu_custom_call.1} parent=27 // pred_check
          %p254 = pneg %p63
        $region30: #{tpu_custom_call.1} parent=27 // pred_check_branch
          %256 = sbr.rel (%p254) target = $region32
        $region31: #{tpu_custom_call.1} parent=27 // pred_region
          %257 = dma.done %s250, 1920
        $region32: #{tpu_custom_call.1} parent=27 // pred_fallthru
          _
        %s258 = sand.u32 %s78, 1
        %s259 = scalar_lea.sflag [#allocation6], %s258
        %s260 = sand.u32 %s78, 1
        %s261 = smul.addr %s260, 120
        %s262 = scalar_lea.vmem [#allocation5], %s261
        // Predicated region
        $region33: #{tpu_custom_call.1} parent=27 // pred_check
          %p263 = pneg %p91
        $region34: #{tpu_custom_call.1} parent=27 // pred_check_branch
          %265 = sbr.rel (%p263) target = $region36
        $region35: #{tpu_custom_call.1} parent=27 // pred_region
          %266 = dma.done %s259, 1920
        $region36: #{tpu_custom_call.1} parent=27 // pred_fallthru
          _
        %s267 = sand.u32 %s50, 1
        %s268 = scalar_lea.sflag [#allocation3], %s267
        %s269 = sand.u32 %s50, 1
        %s270 = smul.addr %s269, 120
        %s271 = scalar_lea.vmem [#allocation2], %s270
        %p272 = pneg %p63
        %p273 = pneg %p60
        %s274 = sand.u32 %s78, 1
        %s275 = scalar_lea.sflag [#allocation6], %s274
        %s276 = sand.u32 %s78, 1
        %s277 = smul.addr %s276, 120
        %s278 = scalar_lea.vmem [#allocation5], %s277
        %p279 = pneg %p91
        %p280 = pneg %p88
        %p281 = pneg %p119
        %p282 = pneg %p116
        %s283 = sand.u32 %s106, 1
        %s284 = scalar_lea.sflag [#allocation4], %s283
        %s285 = sand.u32 %s106, 1
        %s286 = smul.addr %s285, 5
        %s287 = scalar_lea.vmem [#allocation7], %s286
        %p288 = pneg %p147
        %p289 = pneg %p144
        %s290 = sand.u32 %s28, 1
        %s291 = scalar_lea.sflag [#allocation9], %s290
        %s292 = sand.u32 %s134, 1
        %s293 = smul.addr %s292, 5
        %s294 = scalar_lea.vmem [#allocation8], %s293
        %p295 = pneg %p175
        %p296 = pneg %p172
        %s297 = sand.u32 %s28, 1
        %s298 = scalar_lea.sflag [#allocation9], %s297
        %s299 = sand.u32 %s162, 1
        %s300 = smul.addr %s299, 5
        %s301 = scalar_lea.vmem [#allocation10], %s300
        %s302 = smul.u32 3, %s33
        %s303 = smul.u32 3, %s33
        %v304 = vld [vmem:[%s253] sm:$0xff]
        %v305 = vld [vmem:[%s253 + $0x8] sm:$0xff]
        %v306 = vld [vmem:[%s253 + $0x10] sm:$0xff]
        %v307 = vld [vmem:[%s253 + $0x18] sm:$0xff]
        %v308 = vld [vmem:[%s253 + $0x20] sm:$0xff]
        %v309 = vld [vmem:[%s253 + $0x28] sm:$0xff]
        %v310 = vld [vmem:[%s253 + $0x30] sm:$0xff]
        %v311 = vld [vmem:[%s253 + $0x38] sm:$0xff]
        %v312 = vld [vmem:[%s253 + $0x40] sm:$0xff]
        %v313 = vld [vmem:[%s253 + $0x48] sm:$0xff]
        %v314 = vld [vmem:[%s253 + $0x50] sm:$0xff]
        %v315 = vld [vmem:[%s253 + $0x58] sm:$0xff]
        %v316 = vld [vmem:[%s253 + $0x60] sm:$0xff]
        %v317 = vld [vmem:[%s253 + $0x68] sm:$0xff]
        %v318 = vld [vmem:[%s253 + $0x70] sm:$0xff]
        %v319 = vld [vmem:[%s262] sm:$0xff]
        %v320 = vld [vmem:[%s262 + $0x8] sm:$0xff]
        %v321 = vld [vmem:[%s262 + $0x10] sm:$0xff]
        %v322 = vld [vmem:[%s262 + $0x18] sm:$0xff]
        %v323 = vld [vmem:[%s262 + $0x20] sm:$0xff]
        %v324 = vld [vmem:[%s262 + $0x28] sm:$0xff]
        %v325 = vld [vmem:[%s262 + $0x30] sm:$0xff]
        %v326 = vld [vmem:[%s262 + $0x38] sm:$0xff]
        %v327 = vld [vmem:[%s262 + $0x40] sm:$0xff]
        %v328 = vld [vmem:[%s262 + $0x48] sm:$0xff]
        %v329 = vld [vmem:[%s262 + $0x50] sm:$0xff]
        %v330 = vld [vmem:[%s262 + $0x58] sm:$0xff]
        %v331 = vld [vmem:[%s262 + $0x60] sm:$0xff]
        %v332 = vld [vmem:[%s262 + $0x68] sm:$0xff]
        %v333 = vld [vmem:[%s262 + $0x70] sm:$0xff]
        %v334 = vrcp.pop %v304
        %v335 = vmul.f32 %v319, %v334
        %v336 = vrcp.pop %v305
        %v337 = vmul.f32 %v320, %v336
        %v338 = vrcp.pop %v306
        %v339 = vmul.f32 %v321, %v338
        %v340 = vrcp.pop %v307
        %v341 = vmul.f32 %v322, %v340
        %v342 = vrcp.pop %v308
        %v343 = vmul.f32 %v323, %v342
        %v344 = vrcp.pop %v309
        %v345 = vmul.f32 %v324, %v344
        %v346 = vrcp.pop %v310
        %v347 = vmul.f32 %v325, %v346
        %v348 = vrcp.pop %v311
        %v349 = vmul.f32 %v326, %v348
        %v350 = vrcp.pop %v312
        %v351 = vmul.f32 %v327, %v350
        %v352 = vrcp.pop %v313
        %v353 = vmul.f32 %v328, %v352
        %v354 = vrcp.pop %v314
        %v355 = vmul.f32 %v329, %v354
        %v356 = vrcp.pop %v315
        %v357 = vmul.f32 %v330, %v356
        %v358 = vrcp.pop %v316
        %v359 = vmul.f32 %v331, %v358
        %v360 = vrcp.pop %v317
        %v361 = vmul.f32 %v332, %v360
        %v362 = vrcp.pop %v318
        %v363 = vmul.f32 %v333, %v362
        %v364 = vlog2.pop %v335
        %v365 = vmul.f32 %v364, 0.6931472
        %v366 = vlog2.pop %v337
        %v367 = vmul.f32 %v366, 0.6931472
        %v368 = vlog2.pop %v339
        %v369 = vmul.f32 %v368, 0.6931472
        %v370 = vlog2.pop %v341
        %v371 = vmul.f32 %v370, 0.6931472
        %v372 = vlog2.pop %v343
        %v373 = vmul.f32 %v372, 0.6931472
        %v374 = vlog2.pop %v345
        %v375 = vmul.f32 %v374, 0.6931472
        %v376 = vlog2.pop %v347
        %v377 = vmul.f32 %v376, 0.6931472
        %v378 = vlog2.pop %v349
        %v379 = vmul.f32 %v378, 0.6931472
        %v380 = vlog2.pop %v351
        %v381 = vmul.f32 %v380, 0.6931472
        %v382 = vlog2.pop %v353
        %v383 = vmul.f32 %v382, 0.6931472
        %v384 = vlog2.pop %v355
        %v385 = vmul.f32 %v384, 0.6931472
        %v386 = vlog2.pop %v357
        %v387 = vmul.f32 %v386, 0.6931472
        %v388 = vlog2.pop %v359
        %v389 = vmul.f32 %v388, 0.6931472
        %v390 = vlog2.pop %v361
        %v391 = vmul.f32 %v390, 0.6931472
        %v392 = vlog2.pop %v363
        %v393 = vmul.f32 %v392, 0.6931472
        %v394 = vand.u32 2147483647, %v365
        %v395 = vand.u32 2147483647, %v367
        %v396 = vand.u32 2147483647, %v369
        %v397 = vand.u32 2147483647, %v371
        %v398 = vand.u32 2147483647, %v373
        %v399 = vand.u32 2147483647, %v375
        %v400 = vand.u32 2147483647, %v377
        %v401 = vand.u32 2147483647, %v379
        %v402 = vand.u32 2147483647, %v381
        %v403 = vand.u32 2147483647, %v383
        %v404 = vand.u32 2147483647, %v385
        %v405 = vand.u32 2147483647, %v387
        %v406 = vand.u32 2147483647, %v389
        %v407 = vand.u32 2147483647, %v391
        %v408 = vand.u32 2147483647, %v393
        %v409 = vsub.f32 %v319, %v304
        %v410 = vsub.f32 %v320, %v305
        %v411 = vsub.f32 %v321, %v306
        %v412 = vsub.f32 %v322, %v307
        %v413 = vsub.f32 %v323, %v308
        %v414 = vsub.f32 %v324, %v309
        %v415 = vsub.f32 %v325, %v310
        %v416 = vsub.f32 %v326, %v311
        %v417 = vsub.f32 %v327, %v312
        %v418 = vsub.f32 %v328, %v313
        %v419 = vsub.f32 %v329, %v314
        %v420 = vsub.f32 %v330, %v315
        %v421 = vsub.f32 %v331, %v316
        %v422 = vsub.f32 %v332, %v317
        %v423 = vsub.f32 %v333, %v318
        %v424 = vadd.f32 %v394, %v399
        %v425 = vadd.f32 %v424, %v404
        %v426 = vrot.slane %v425, 4
        %v427 = vadd.f32 %v425, %v426
        %v428 = vrot.slane %v427, 2
        %v429 = vadd.f32 %v427, %v428
        %v430 = vrot.slane %v429, 1
        %v431 = vadd.f32 %v429, %v430
        %v432 = vadd.f32 %v395, %v400
        %v433 = vadd.f32 %v432, %v405
        %v434 = vrot.slane %v433, 4
        %v435 = vadd.f32 %v433, %v434
        %v436 = vrot.slane %v435, 2
        %v437 = vadd.f32 %v435, %v436
        %v438 = vrot.slane %v437, 1
        %v439 = vadd.f32 %v437, %v438
        %v440 = vadd.f32 %v396, %v401
        %v441 = vadd.f32 %v440, %v406
        %v442 = vrot.slane %v441, 4
        %v443 = vadd.f32 %v441, %v442
        %v444 = vrot.slane %v443, 2
        %v445 = vadd.f32 %v443, %v444
        %v446 = vrot.slane %v445, 1
        %v447 = vadd.f32 %v445, %v446
        %v448 = vadd.f32 %v397, %v402
        %v449 = vadd.f32 %v448, %v407
        %v450 = vrot.slane %v449, 4
        %v451 = vadd.f32 %v449, %v450
        %v452 = vrot.slane %v451, 2
        %v453 = vadd.f32 %v451, %v452
        %v454 = vrot.slane %v453, 1
        %v455 = vadd.f32 %v453, %v454
        %v456 = vadd.f32 %v398, %v403
        %v457 = vadd.f32 %v456, %v408
        %v458 = vrot.slane %v457, 4
        %v459 = vadd.f32 %v457, %v458
        %v460 = vrot.slane %v459, 2
        %v461 = vadd.f32 %v459, %v460
        %v462 = vrot.slane %v461, 1
        %v463 = vadd.f32 %v461, %v462
        %v469 = vcombine.low %v431, %v439
        %v470 = vcombine.low %v447, %v455
        %v472 = vunpack.c.l.s4 1966171168
        %v473 = vunpack.c.0.s8 %v472
        %v474 = vlaneseq
        %v475 = vshrl.u32 %v474, 7
        %v476 = vsub.s32 %v473, %v475
        %v477 = vrot.slane %v469, %v476
        %v479 = vunpack.c.l.s4 1966171168
        %v480 = vunpack.c.0.s8 %v479
        %v481 = vlaneseq
        %v482 = vshrl.u32 %v481, 7
        %v483 = vsub.s32 %v480, %v482
        %v484 = vrot.slane %v470, %v483
        %v486 = vunpack.c.l.s4 1966171168
        %v487 = vunpack.c.0.s8 %v486
        %v488 = vlaneseq
        %v489 = vshrl.u32 %v488, 7
        %v490 = vsub.s32 %v487, %v489
        %v491 = vrot.slane %v463, %v490
        %v492 = vcombine.low %v477, %v484
        %v494 = vunpack.c.l.s4 1966171168
        %v495 = vunpack.c.0.s8 %v494
        %v496 = vlaneseq
        %v497 = vshrl.u32 %v496, 7
        %v498 = vsub.s32 %v495, %v497
        %v499 = vrot.slane %v492, %v498
        %v501 = vunpack.c.l.s4 1966171168
        %v502 = vunpack.c.0.s8 %v501
        %v503 = vlaneseq
        %v504 = vshrl.u32 %v503, 7
        %v505 = vsub.s32 %v502, %v504
        %v506 = vrot.slane %v491, %v505
        %v507 = vcombine.low %v499, %v506
        %v509 = vlaneseq
        %vm510 = vcmp.ge.s32.totalorder %v509, 0
        %vm511 = vcmp.lt.s32.totalorder %v509, 640
        %vm512 = vmand %vm510, %vm511
        %513 = vst.msk [vmem:[%s287] sm:$0x1f] %vm512, %v507
        %v514 = vmul.f32 %v409, %v409
        %v515 = vmul.f32 %v410, %v410
        %v516 = vmul.f32 %v411, %v411
        %v517 = vmul.f32 %v412, %v412
        %v518 = vmul.f32 %v413, %v413
        %v519 = vmul.f32 %v414, %v414
        %v520 = vmul.f32 %v415, %v415
        %v521 = vmul.f32 %v416, %v416
        %v522 = vmul.f32 %v417, %v417
        %v523 = vmul.f32 %v418, %v418
        %v524 = vmul.f32 %v419, %v419
        %v525 = vmul.f32 %v420, %v420
        %v526 = vmul.f32 %v421, %v421
        %v527 = vmul.f32 %v422, %v422
        %v528 = vmul.f32 %v423, %v423
        %v529 = vadd.f32 %v514, %v519
        %v530 = vadd.f32 %v529, %v524
        %v531 = vrot.slane %v530, 4
        %v532 = vadd.f32 %v530, %v531
        %v533 = vrot.slane %v532, 2
        %v534 = vadd.f32 %v532, %v533
        %v535 = vrot.slane %v534, 1
        %v536 = vadd.f32 %v534, %v535
        %v537 = vadd.f32 %v515, %v520
        %v538 = vadd.f32 %v537, %v525
        %v539 = vrot.slane %v538, 4
        %v540 = vadd.f32 %v538, %v539
        %v541 = vrot.slane %v540, 2
        %v542 = vadd.f32 %v540, %v541
        %v543 = vrot.slane %v542, 1
        %v544 = vadd.f32 %v542, %v543
        %v545 = vadd.f32 %v516, %v521
        %v546 = vadd.f32 %v545, %v526
        %v547 = vrot.slane %v546, 4
        %v548 = vadd.f32 %v546, %v547
        %v549 = vrot.slane %v548, 2
        %v550 = vadd.f32 %v548, %v549
        %v551 = vrot.slane %v550, 1
        %v552 = vadd.f32 %v550, %v551
        %v553 = vadd.f32 %v517, %v522
        %v554 = vadd.f32 %v553, %v527
        %v555 = vrot.slane %v554, 4
        %v556 = vadd.f32 %v554, %v555
        %v557 = vrot.slane %v556, 2
        %v558 = vadd.f32 %v556, %v557
        %v559 = vrot.slane %v558, 1
        %v560 = vadd.f32 %v558, %v559
        %v561 = vadd.f32 %v518, %v523
        %v562 = vadd.f32 %v561, %v528
        %v563 = vrot.slane %v562, 4
        %v564 = vadd.f32 %v562, %v563
        %v565 = vrot.slane %v564, 2
        %v566 = vadd.f32 %v564, %v565
        %v567 = vrot.slane %v566, 1
        %v568 = vadd.f32 %v566, %v567
        %v574 = vcombine.low %v536, %v544
        %v575 = vcombine.low %v552, %v560
        %v577 = vunpack.c.l.s4 1966171168
        %v578 = vunpack.c.0.s8 %v577
        %v579 = vlaneseq
        %v580 = vshrl.u32 %v579, 7
        %v581 = vsub.s32 %v578, %v580
        %v582 = vrot.slane %v574, %v581
        %v584 = vunpack.c.l.s4 1966171168
        %v585 = vunpack.c.0.s8 %v584
        %v586 = vlaneseq
        %v587 = vshrl.u32 %v586, 7
        %v588 = vsub.s32 %v585, %v587
        %v589 = vrot.slane %v575, %v588
        %v591 = vunpack.c.l.s4 1966171168
        %v592 = vunpack.c.0.s8 %v591
        %v593 = vlaneseq
        %v594 = vshrl.u32 %v593, 7
        %v595 = vsub.s32 %v592, %v594
        %v596 = vrot.slane %v568, %v595
        %v597 = vcombine.low %v582, %v589
        %v599 = vunpack.c.l.s4 1966171168
        %v600 = vunpack.c.0.s8 %v599
        %v601 = vlaneseq
        %v602 = vshrl.u32 %v601, 7
        %v603 = vsub.s32 %v600, %v602
        %v604 = vrot.slane %v597, %v603
        %v606 = vunpack.c.l.s4 1966171168
        %v607 = vunpack.c.0.s8 %v606
        %v608 = vlaneseq
        %v609 = vshrl.u32 %v608, 7
        %v610 = vsub.s32 %v607, %v609
        %v611 = vrot.slane %v596, %v610
        %v612 = vcombine.low %v604, %v611
        %614 = vst.msk [vmem:[%s294] sm:$0x1f] %vm512, %v612
        %v615 = vmul.f32 %v319, %v319
        %v616 = vmul.f32 %v320, %v320
        %v617 = vmul.f32 %v321, %v321
        %v618 = vmul.f32 %v322, %v322
        %v619 = vmul.f32 %v323, %v323
        %v620 = vmul.f32 %v324, %v324
        %v621 = vmul.f32 %v325, %v325
        %v622 = vmul.f32 %v326, %v326
        %v623 = vmul.f32 %v327, %v327
        %v624 = vmul.f32 %v328, %v328
        %v625 = vmul.f32 %v329, %v329
        %v626 = vmul.f32 %v330, %v330
        %v627 = vmul.f32 %v331, %v331
        %v628 = vmul.f32 %v332, %v332
        %v629 = vmul.f32 %v333, %v333
        %v630 = vadd.f32 %v615, %v620
        %v631 = vadd.f32 %v630, %v625
        %v632 = vrot.slane %v631, 4
        %v633 = vadd.f32 %v631, %v632
        %v634 = vrot.slane %v633, 2
        %v635 = vadd.f32 %v633, %v634
        %v636 = vrot.slane %v635, 1
        %v637 = vadd.f32 %v635, %v636
        %v638 = vadd.f32 %v616, %v621
        %v639 = vadd.f32 %v638, %v626
        %v640 = vrot.slane %v639, 4
        %v641 = vadd.f32 %v639, %v640
        %v642 = vrot.slane %v641, 2
        %v643 = vadd.f32 %v641, %v642
        %v644 = vrot.slane %v643, 1
        %v645 = vadd.f32 %v643, %v644
        %v646 = vadd.f32 %v617, %v622
        %v647 = vadd.f32 %v646, %v627
        %v648 = vrot.slane %v647, 4
        %v649 = vadd.f32 %v647, %v648
        %v650 = vrot.slane %v649, 2
        %v651 = vadd.f32 %v649, %v650
        %v652 = vrot.slane %v651, 1
        %v653 = vadd.f32 %v651, %v652
        %v654 = vadd.f32 %v618, %v623
        %v655 = vadd.f32 %v654, %v628
        %v656 = vrot.slane %v655, 4
        %v657 = vadd.f32 %v655, %v656
        %v658 = vrot.slane %v657, 2
        %v659 = vadd.f32 %v657, %v658
        %v660 = vrot.slane %v659, 1
        %v661 = vadd.f32 %v659, %v660
        %v662 = vadd.f32 %v619, %v624
        %v663 = vadd.f32 %v662, %v629
        %v664 = vrot.slane %v663, 4
        %v665 = vadd.f32 %v663, %v664
        %v666 = vrot.slane %v665, 2
        %v667 = vadd.f32 %v665, %v666
        %v668 = vrot.slane %v667, 1
        %v669 = vadd.f32 %v667, %v668
        %v675 = vcombine.low %v637, %v645
        %v676 = vcombine.low %v653, %v661
        %v678 = vunpack.c.l.s4 1966171168
        %v679 = vunpack.c.0.s8 %v678
        %v680 = vlaneseq
        %v681 = vshrl.u32 %v680, 7
        %v682 = vsub.s32 %v679, %v681
        %v683 = vrot.slane %v675, %v682
        %v685 = vunpack.c.l.s4 1966171168
        %v686 = vunpack.c.0.s8 %v685
        %v687 = vlaneseq
        %v688 = vshrl.u32 %v687, 7
        %v689 = vsub.s32 %v686, %v688
        %v690 = vrot.slane %v676, %v689
        %v692 = vunpack.c.l.s4 1966171168
        %v693 = vunpack.c.0.s8 %v692
        %v694 = vlaneseq
        %v695 = vshrl.u32 %v694, 7
        %v696 = vsub.s32 %v693, %v695
        %v697 = vrot.slane %v669, %v696
        %v698 = vcombine.low %v683, %v690
        %v700 = vunpack.c.l.s4 1966171168
        %v701 = vunpack.c.0.s8 %v700
        %v702 = vlaneseq
        %v703 = vshrl.u32 %v702, 7
        %v704 = vsub.s32 %v701, %v703
        %v705 = vrot.slane %v698, %v704
        %v707 = vunpack.c.l.s4 1966171168
        %v708 = vunpack.c.0.s8 %v707
        %v709 = vlaneseq
        %v710 = vshrl.u32 %v709, 7
        %v711 = vsub.s32 %v708, %v710
        %v712 = vrot.slane %v697, %v711
        %v713 = vcombine.low %v705, %v712
        %715 = vst.msk [vmem:[%s301] sm:$0x1f] %vm512, %v713
        %s716 = sand.u32 %s106, 1
        %s717 = scalar_lea.sflag [#allocation4], %s716
        %s718 = sand.u32 %s106, 1
        %s719 = smul.addr %s718, 5
        %s720 = scalar_lea.vmem [#allocation7], %s719
        %s721 = sand.u32 %s28, 1
        %s722 = scalar_lea.sflag [#allocation9], %s721
        %s723 = sand.u32 %s134, 1
        %s724 = smul.addr %s723, 5
        %s725 = scalar_lea.vmem [#allocation8], %s724
        %s726 = sand.u32 %s28, 1
        %s727 = scalar_lea.sflag [#allocation9], %s726
        %s728 = sand.u32 %s162, 1
        %s729 = smul.addr %s728, 5
        %s730 = scalar_lea.vmem [#allocation10], %s729
        // Predicated region
        $region37: #{tpu_custom_call.1} parent=27 // pred_check
          %p731 = pneg %p116
        $region38: #{tpu_custom_call.1} parent=27 // pred_check_branch
          %733 = sbr.rel (%p731) target = $region40
        $region39: #{tpu_custom_call.1} parent=27 // pred_region
          %s735 = ssub.s32 80, 80
          %736 = vsyncadd %s717, %s735
          %s737 = smul.addr %s33, 5
          %s738 = smul.addr %s32, 5
          %s739 = sadd.s32 %s737, %s738
          %s740 = smul.addr %s739, 16
          %s741 = scalar_lea.hbm %s2, %s740
          %s743 = sshll.u32 %s720, 4
          %s744 = int_to_ptr.vmem [resolvable:$true] %s743
          %746 = dma.vmem_to_hbm [thread:$0]  %s744, 80, %s741, %s717
        $region40: #{tpu_custom_call.1} parent=27 // pred_fallthru
          _
        // Predicated region
        $region41: #{tpu_custom_call.1} parent=27 // pred_check
          %p747 = pneg %p144
        $region42: #{tpu_custom_call.1} parent=27 // pred_check_branch
          %749 = sbr.rel (%p747) target = $region44
        $region43: #{tpu_custom_call.1} parent=27 // pred_region
          %s751 = ssub.s32 80, 80
          %752 = vsyncadd %s722, %s751
          %s753 = smul.addr %s33, 5
          %s754 = smul.addr %s32, 5
          %s755 = sadd.s32 %s753, %s754
          %s756 = smul.addr %s755, 16
          %s757 = scalar_lea.hbm %s3, %s756
          %s759 = sshll.u32 %s725, 4
          %s760 = int_to_ptr.vmem [resolvable:$true] %s759
          %762 = dma.vmem_to_hbm [thread:$0]  %s760, 80, %s757, %s722
        $region44: #{tpu_custom_call.1} parent=27 // pred_fallthru
          _
        // Predicated region
        $region45: #{tpu_custom_call.1} parent=27 // pred_check
          %p763 = pneg %p172
        $region46: #{tpu_custom_call.1} parent=27 // pred_check_branch
          %765 = sbr.rel (%p763) target = $region48
        $region47: #{tpu_custom_call.1} parent=27 // pred_region
          %s767 = ssub.s32 80, 80
          %768 = vsyncadd %s727, %s767
          %s769 = smul.addr %s33, 5
          %s770 = smul.addr %s32, 5
          %s771 = sadd.s32 %s769, %s770
          %s772 = smul.addr %s771, 16
          %s773 = scalar_lea.hbm %s4, %s772
          %s775 = sshll.u32 %s730, 4
          %s776 = int_to_ptr.vmem [resolvable:$true] %s775
          %778 = dma.vmem_to_hbm [thread:$0]  %s776, 80, %s773, %s727
        $region48: #{tpu_custom_call.1} parent=27 // pred_fallthru
          _
      $region28: #{tpu_custom_call.1} parent=5 // pred_fallthru
        _
      %p779 = scmp.le.s32.totalorder 2, %s23
      // Predicated region
      $region49: #{tpu_custom_call.1} parent=5 // pred_check
        %p780 = pneg %p779
      $region50: #{tpu_custom_call.1} parent=5 // pred_check_branch
        %782 = sbr.rel (%p780) target = $region52
      $region51: #{tpu_custom_call.1} parent=5 // pred_region
        %s783 = ssub.s32 %s23, 2
        // Predicated region
        $region53: #{tpu_custom_call.1} parent=51 // pred_check
          %p784 = pneg %p122
        $region54: #{tpu_custom_call.1} parent=51 // pred_check_branch
          %786 = sbr.rel (%p784) target = $region56
        $region55: #{tpu_custom_call.1} parent=51 // pred_region
          %s787 = sand.u32 %s107, 1
          %s788 = scalar_lea.sflag [#allocation4], %s787
          %s789 = sand.u32 %s107, 1
          %s790 = smul.addr %s789, 5
          %s791 = scalar_lea.vmem [#allocation7], %s790
          %792 = dma.done %s788, 80
        $region56: #{tpu_custom_call.1} parent=51 // pred_fallthru
          _
        // Predicated region
        $region57: #{tpu_custom_call.1} parent=51 // pred_check
          %p793 = pneg %p150
        $region58: #{tpu_custom_call.1} parent=51 // pred_check_branch
          %795 = sbr.rel (%p793) target = $region60
        $region59: #{tpu_custom_call.1} parent=51 // pred_region
          %s796 = sand.u32 %s29, 1
          %s797 = scalar_lea.sflag [#allocation9], %s796
          %s798 = sand.u32 %s135, 1
          %s799 = smul.addr %s798, 5
          %s800 = scalar_lea.vmem [#allocation8], %s799
          %801 = dma.done %s797, 80
        $region60: #{tpu_custom_call.1} parent=51 // pred_fallthru
          _
        // Predicated region
        $region61: #{tpu_custom_call.1} parent=51 // pred_check
          %p802 = pneg %p178
        $region62: #{tpu_custom_call.1} parent=51 // pred_check_branch
          %804 = sbr.rel (%p802) target = $region64
        $region63: #{tpu_custom_call.1} parent=51 // pred_region
          %s805 = sand.u32 %s29, 1
          %s806 = scalar_lea.sflag [#allocation9], %s805
          %s807 = sand.u32 %s163, 1
          %s808 = smul.addr %s807, 5
          %s809 = scalar_lea.vmem [#allocation10], %s808
          %810 = dma.done %s806, 80
        $region64: #{tpu_custom_call.1} parent=51 // pred_fallthru
          _
      $region52: #{tpu_custom_call.1} parent=5 // pred_fallthru
        _
    $region6: #{tpu_custom_call.1} parent=1 // loop_footer
      %s27 = sadd.s32 1, %s23
    $region7: #{tpu_custom_call.1} parent=1 // loop_footer_branch
      %22 = sbr.rel target = $region3
    $region8: #{tpu_custom_call.1} parent=1 // loop_exit
      _
    %811 = vsyncpa [#allocation3], 1
    %s812 = scalar_lea.sflag [#allocation3], 1
    %813 = vsyncpa %s812, 1
    %814 = vsyncpa [#allocation6], 1
    %s815 = scalar_lea.sflag [#allocation6], 1
    %816 = vsyncpa %s815, 1
    %817 = vsyncpa [#allocation4], 1
    %s818 = scalar_lea.sflag [#allocation4], 1
    %819 = vsyncpa %s818, 1
    %820 = vsyncpa [#allocation9], 1
    %s821 = scalar_lea.sflag [#allocation9], 1
    %822 = vsyncpa %s821, 1

</llo_original>
